<compile_context>
chip_gen: v7x
topology: tpu7x:2x2x1
jax: 0.10.0
libtpu: 0.0.40
codegen_flags: <defaults>
</compile_context>

<pallas_src>
import jax
import jax.numpy as jnp
from jax.experimental import pallas as pl
from jax.experimental.pallas import tpu as pltpu

LANE = 128
# Per-array block cap: 1 MiB per block => <= ~6 MiB of live pipeline VMEM
# (3 arrays x 2 buffers), comfortably inside every generation's scoped default
# (16 MiB v5e, 32 MiB v6e/v7x) and v7x's 64 MiB physical VMEM.
_MAX_BLOCK_BYTES = 1 << 20


def _add_kernel(a_ref, b_ref, o_ref):
    o_ref[...] = a_ref[...] + b_ref[...]


def _sublane_multiple(dtype) -> int:
    # Native packed sublane tile: 8 for 32-bit, 16 for 16-bit, 32 for 8-bit.
    itemsize = jnp.dtype(dtype).itemsize
    return {4: 8, 2: 16, 1: 32}.get(itemsize, 8)


def _tensorcores_per_chip() -> int:
    # v7x has 2 TensorCores per chip; v5e/v6e have 1.  Used only to decide how
    # many equal-sized grid steps to emit so the "parallel" grid axis can be
    # sharded evenly across cores.
    try:
        kind = jax.devices()[0].device_kind.lower()
    except Exception:
        return 1
    return 2 if "v7" in kind else 1


def _choose_tile_rows(rows: int, dtype) -> int:
    sub = _sublane_multiple(dtype)
    itemsize = jnp.dtype(dtype).itemsize
    max_rows = max(sub, (_MAX_BLOCK_BYTES // (LANE * itemsize)) // sub * sub)
    steps = max(_tensorcores_per_chip(), pl.cdiv(rows, max_rows))
    if steps <= 1:
        # Single grid step: one block covering the whole slab (block == full
        # array dim, so the (8,128) divisibility constraint does not apply).
        return rows
    # Balance the blocks across the steps/cores, sublane-aligned.
    tile = pl.cdiv(pl.cdiv(rows, steps), sub) * sub
    return max(sub, min(tile, max_rows))


def _add_2d(a2: jax.Array, b2: jax.Array, *, donate_first: bool = False) -> jax.Array:
    rows = a2.shape[0]
    tile_rows = _choose_tile_rows(rows, a2.dtype)
    grid = (pl.cdiv(rows, tile_rows),)
    n = a2.size
    itemsize = jnp.dtype(a2.dtype).itemsize
    return pl.pallas_call(
        _add_kernel,
        out_shape=jax.ShapeDtypeStruct(a2.shape, a2.dtype),
        grid_spec=pltpu.PrefetchScalarGridSpec(
            num_scalar_prefetch=0,
            grid=grid,
            in_specs=[
                pl.BlockSpec((tile_rows, LANE), lambda i: (i, 0)),
                pl.BlockSpec((tile_rows, LANE), lambda i: (i, 0)),
            ],
            out_specs=pl.BlockSpec((tile_rows, LANE), lambda i: (i, 0)),
        ),
        compiler_params=pltpu.CompilerParams(
            dimension_semantics=("parallel",),
        ),
        cost_estimate=pl.CostEstimate(
            flops=n, transcendentals=0, bytes_accessed=3 * n * itemsize
        ),
        input_output_aliases=({0: 0} if donate_first else {}),
    )(a2, b2)


def pallas_add(a: jax.Array, b: jax.Array, *, donate_first: bool = False) -> jax.Array:
    """Elementwise a + b.  Set donate_first=True only if `a` can be donated."""
    assert a.shape == b.shape and a.dtype == b.dtype
    orig_shape = a.shape
    n = a.size

    if n > 0 and n % LANE == 0:
        # Fast path (always hit for the module's [1,1024,14,14] f32 inputs):
        # free contiguous reshape to a lane-dense [rows, 128] slab, minimal
        # 3n-byte HBM traffic.
        rows = n // LANE
        out2 = _add_2d(
            a.reshape(rows, LANE), b.reshape(rows, LANE), donate_first=donate_first
        )
        return out2.reshape(orig_shape)

    # Ragged fallback (never hit for this module): run the 128-aligned bulk
    # through the kernel and add the <128-element tail with a plain XLA add —
    # no padded copies of inputs / no output slicing.
    # TODO(synk): handle the tail inside the kernel with a masked pltpu.store.
    flat_a = a.reshape(-1)
    flat_b = b.reshape(-1)
    bulk = (n // LANE) * LANE
    pieces = []
    if bulk:
        pieces.append(
            _add_2d(
                flat_a[:bulk].reshape(-1, LANE), flat_b[:bulk].reshape(-1, LANE)
            ).reshape(-1)
        )
    pieces.append(flat_a[bulk:] + flat_b[bulk:])
    return jnp.concatenate(pieces).reshape(orig_shape)


class M:
    """JAX/Pallas equivalent of the PyTorch module M (no parameters)."""

    def __call__(self, x158: jax.Array, x150: jax.Array) -> jax.Array:
        return pallas_add(x158, x150)


if __name__ == "__main__":
    key = jax.random.PRNGKey(0)
    k1, k2 = jax.random.split(key)

    # Shape taken directly from the PyTorch module spec: [1, 1024, 14, 14].
    shape = (1, 1024, 14, 14)
    x158 = jax.random.normal(k1, shape, dtype=jnp.float32)
    x150 = jax.random.normal(k2, shape, dtype=jnp.float32)

    m = M()
    out = jax.block_until_ready(m(x158, x150))

    ref = x158 + x150
    assert out.shape == shape
    assert jnp.allclose(out, ref, atol=1e-6, rtol=1e-6)
    print("KERNEL_OK")
</pallas_src>

<mosaic_0001>
module attributes {stable_mosaic.version = 11 : i64} {
  func.func @_add_kernel(%arg0: i32, %arg1: memref<1568x128xf32, #tpu.memory_space<vmem>>, %arg2: memref<1568x128xf32, #tpu.memory_space<vmem>>, %arg3: memref<1568x128xf32, #tpu.memory_space<vmem>>) attributes {dimension_semantics = [#tpu.dimension_semantics<parallel>], iteration_bounds = array<i64: 1>, scalar_prefetch = 0 : i64, scratch_operands = 0 : i64, tpu.core_type = #tpu.core_type<tc>, window_params = [{transform_indices = @transform_0, window_bounds = array<i64: 1568, 128>}, {transform_indices = @transform_1, window_bounds = array<i64: 1568, 128>}, {transform_indices = @transform_2, window_bounds = array<i64: 1568, 128>}]} {
    %c0 = arith.constant 0 : index
    %c0_0 = arith.constant 0 : index
    %0 = vector.load %arg1[%c0, %c0_0] : memref<1568x128xf32, #tpu.memory_space<vmem>>, vector<1568x128xf32>
    %c0_1 = arith.constant 0 : index
    %c0_2 = arith.constant 0 : index
    %1 = vector.load %arg2[%c0_1, %c0_2] : memref<1568x128xf32, #tpu.memory_space<vmem>>, vector<1568x128xf32>
    %2 = arith.addf %0, %1 : vector<1568x128xf32>
    %c0_3 = arith.constant 0 : index
    %c0_4 = arith.constant 0 : index
    %3 = vector.load %arg3[%c0_3, %c0_4] : memref<1568x128xf32, #tpu.memory_space<vmem>>, vector<1568x128xf32>
    tpu.vector_store %arg3[%c0_3, %c0_4], %2 {strides = array<i32>} : memref<1568x128xf32, #tpu.memory_space<vmem>>, vector<1568x128xf32>,
    return
  }
  func.func @transform_0(%arg0: i32) -> (i32, i32) {
    %c0_i32 = arith.constant 0 : i32
    %c0_i32_0 = arith.constant 0 : i32
    return %arg0, %c0_i32 : i32, i32
  }
  func.func @transform_1(%arg0: i32) -> (i32, i32) {
    %c0_i32 = arith.constant 0 : i32
    %c0_i32_0 = arith.constant 0 : i32
    return %arg0, %c0_i32 : i32, i32
  }
  func.func @transform_2(%arg0: i32) -> (i32, i32) {
    %c0_i32 = arith.constant 0 : i32
    %c0_i32_0 = arith.constant 0 : i32
    return %arg0, %c0_i32 : i32, i32
  }
}

</mosaic_0001>

<llo_original>
// kernel: tpu_custom_call.1
$region0: #{tpu_custom_call.1}
  #allocation0 [shape = 'u32[]', space=smem, size = 0x4, offset = 0x4, fixed_abs, tag = 'smem constant byte address 0x4 - core index']
  #allocation1 [shape = 'u32[144,128]{1,0:T(1,128)}', space=vmem, size = 0x12000, scoped, tag = 'internal scratch']
  %s0 = inlined_call_operand.hbm [shape: f32[1568,128], index: 0, kind: input, shape index: {}]
  %s1 = inlined_call_operand.hbm [shape: f32[1568,128], index: 1, kind: input, shape index: {}]
  %s2 = inlined_call_operand.hbm [shape: f32[1568,128], index: 2, kind: output, shape index: {}]
  %s3 = sld [smem:[#allocation0]]
  $region26: #{tpu_custom_call.1} parent=0
    _
  %s5 = ssub.s32 1, %s3
  %s6 = scalar_select 0, %s5, %s3
  $region1: #{tpu_custom_call.1} parent=0
    #allocation2 [shape = 'u8[802816]{0}', space=vmem, size = 0xc4000, scoped, tag = 'input window, operand 0, single buffered']
    #allocation3 [shape = 's32[1]{0}', space=sflag, size = 0x4, scoped, tag = 'scoped memory for tpu_custom_call.1']
    #allocation4 [shape = 's32[1]{0}', space=sflag, size = 0x4, scoped, tag = 'scoped memory for tpu_custom_call.1']
    #allocation5 [shape = 'u8[802816]{0}', space=vmem, size = 0xc4000, scoped, tag = 'input window, operand 1, single buffered']
    #allocation6 [shape = 's32[1]{0}', space=sflag, size = 0x4, scoped, tag = 'scoped memory for tpu_custom_call.1']
    #allocation7 [shape = 'u8[802816]{0}', space=vmem, size = 0xc4000, scoped, tag = 'output window, operand 0, single buffered']
    %7 = vsyncpa [#allocation3], 0
    %8 = vsyncpa [#allocation6], 0
    %9 = vsyncpa [#allocation4], 0
    // Predicated region
    $region2: #{tpu_custom_call.1} parent=1 // pred_check
      _
    $region3: #{tpu_custom_call.1} parent=1 // pred_check_branch
      %11 = sbr.rel (0) target = $region5
    $region4: #{tpu_custom_call.1} parent=1 // pred_region
      %s13 = ssub.s32 25088, 25088
      %14 = vsyncadd [#allocation3], %s13
      %s15 = sshll.u32 [#allocation2], 4
      %s16 = int_to_ptr.vmem [resolvable:$true] %s15
      %21 = dma.hbm_to_vmem [thread:$0]  %s0, 25088, %s16, [#allocation3], 128, 128, 8
    $region5: #{tpu_custom_call.1} parent=1 // pred_fallthru
      _
    // Predicated region
    $region6: #{tpu_custom_call.1} parent=1 // pred_check
      _
    $region7: #{tpu_custom_call.1} parent=1 // pred_check_branch
      %23 = sbr.rel (0) target = $region9
    $region8: #{tpu_custom_call.1} parent=1 // pred_region
      %s25 = ssub.s32 25088, 25088
      %26 = vsyncadd [#allocation6], %s25
      %s27 = sshll.u32 [#allocation5], 4
      %s28 = int_to_ptr.vmem [resolvable:$true] %s27
      %33 = dma.hbm_to_vmem [thread:$0]  %s1, 25088, %s28, [#allocation6], 128, 128, 8
    $region9: #{tpu_custom_call.1} parent=1 // pred_fallthru
      _
    // Predicated region
    $region10: #{tpu_custom_call.1} parent=1 // pred_check
      _
    $region11: #{tpu_custom_call.1} parent=1 // pred_check_branch
      %35 = sbr.rel (0) target = $region13
    $region12: #{tpu_custom_call.1} parent=1 // pred_region
      %36 = dma.done [#allocation3], 25088
    $region13: #{tpu_custom_call.1} parent=1 // pred_fallthru
      _
    // Predicated region
    $region14: #{tpu_custom_call.1} parent=1 // pred_check
      _
    $region15: #{tpu_custom_call.1} parent=1 // pred_check_branch
      %38 = sbr.rel (0) target = $region17
    $region16: #{tpu_custom_call.1} parent=1 // pred_region
      %39 = dma.done [#allocation6], 25088
    $region17: #{tpu_custom_call.1} parent=1 // pred_fallthru
      _
    %v40 = vld [vmem:[#allocation2] sm:$0xff]
    %v41 = vld [vmem:[#allocation2 + $0x8] sm:$0xff]
    %v42 = vld [vmem:[#allocation2 + $0x10] sm:$0xff]
    %v43 = vld [vmem:[#allocation2 + $0x18] sm:$0xff]
    %v44 = vld [vmem:[#allocation2 + $0x20] sm:$0xff]
    %v45 = vld [vmem:[#allocation2 + $0x28] sm:$0xff]
    %v46 = vld [vmem:[#allocation2 + $0x30] sm:$0xff]
    %v47 = vld [vmem:[#allocation2 + $0x38] sm:$0xff]
    %v48 = vld [vmem:[#allocation2 + $0x40] sm:$0xff]
    %v49 = vld [vmem:[#allocation2 + $0x48] sm:$0xff]
    %v50 = vld [vmem:[#allocation2 + $0x50] sm:$0xff]
    %v51 = vld [vmem:[#allocation2 + $0x58] sm:$0xff]
    %v52 = vld [vmem:[#allocation2 + $0x60] sm:$0xff]
    %v53 = vld [vmem:[#allocation2 + $0x68] sm:$0xff]
    %v54 = vld [vmem:[#allocation2 + $0x70] sm:$0xff]
    %v55 = vld [vmem:[#allocation2 + $0x78] sm:$0xff]
    %v56 = vld [vmem:[#allocation2 + $0x80] sm:$0xff]
    %v57 = vld [vmem:[#allocation2 + $0x88] sm:$0xff]
    %v58 = vld [vmem:[#allocation2 + $0x90] sm:$0xff]
    %v59 = vld [vmem:[#allocation2 + $0x98] sm:$0xff]
    %v60 = vld [vmem:[#allocation2 + $0xa0] sm:$0xff]
    %v61 = vld [vmem:[#allocation2 + $0xa8] sm:$0xff]
    %v62 = vld [vmem:[#allocation2 + $0xb0] sm:$0xff]
    %v63 = vld [vmem:[#allocation2 + $0xb8] sm:$0xff]
    %v64 = vld [vmem:[#allocation2 + $0xc0] sm:$0xff]
    %v65 = vld [vmem:[#allocation2 + $0xc8] sm:$0xff]
    %v66 = vld [vmem:[#allocation2 + $0xd0] sm:$0xff]
    %v67 = vld [vmem:[#allocation2 + $0xd8] sm:$0xff]
    %v68 = vld [vmem:[#allocation2 + $0xe0] sm:$0xff]
    %v69 = vld [vmem:[#allocation2 + $0xe8] sm:$0xff]
    %v70 = vld [vmem:[#allocation2 + $0xf0] sm:$0xff]
    %v71 = vld [vmem:[#allocation2 + $0xf8] sm:$0xff]
    %v72 = vld [vmem:[#allocation2 + $0x100] sm:$0xff]
    %v73 = vld [vmem:[#allocation2 + $0x108] sm:$0xff]
    %v74 = vld [vmem:[#allocation2 + $0x110] sm:$0xff]
    %v75 = vld [vmem:[#allocation2 + $0x118] sm:$0xff]
    %v76 = vld [vmem:[#allocation2 + $0x120] sm:$0xff]
    %v77 = vld [vmem:[#allocation2 + $0x128] sm:$0xff]
    %v78 = vld [vmem:[#allocation2 + $0x130] sm:$0xff]
    %v79 = vld [vmem:[#allocation2 + $0x138] sm:$0xff]
    %v80 = vld [vmem:[#allocation2 + $0x140] sm:$0xff]
    %v81 = vld [vmem:[#allocation2 + $0x148] sm:$0xff]
    %v82 = vld [vmem:[#allocation2 + $0x150] sm:$0xff]
    %v83 = vld [vmem:[#allocation2 + $0x158] sm:$0xff]
    %v84 = vld [vmem:[#allocation2 + $0x160] sm:$0xff]
    %v85 = vld [vmem:[#allocation2 + $0x168] sm:$0xff]
    %v86 = vld [vmem:[#allocation2 + $0x170] sm:$0xff]
    %v87 = vld [vmem:[#allocation2 + $0x178] sm:$0xff]
    %v88 = vld [vmem:[#allocation2 + $0x180] sm:$0xff]
    %v89 = vld [vmem:[#allocation2 + $0x188] sm:$0xff]
    %v90 = vld [vmem:[#allocation2 + $0x190] sm:$0xff]
    %v91 = vld [vmem:[#allocation2 + $0x198] sm:$0xff]
    %v92 = vld [vmem:[#allocation2 + $0x1a0] sm:$0xff]
    %v93 = vld [vmem:[#allocation2 + $0x1a8] sm:$0xff]
    %v94 = vld [vmem:[#allocation2 + $0x1b0] sm:$0xff]
    %v95 = vld [vmem:[#allocation2 + $0x1b8] sm:$0xff]
    %v96 = vld [vmem:[#allocation2 + $0x1c0] sm:$0xff]
    %v97 = vld [vmem:[#allocation2 + $0x1c8] sm:$0xff]
    %v98 = vld [vmem:[#allocation2 + $0x1d0] sm:$0xff]
    %v99 = vld [vmem:[#allocation2 + $0x1d8] sm:$0xff]
    %v100 = vld [vmem:[#allocation2 + $0x1e0] sm:$0xff]
    %v101 = vld [vmem:[#allocation2 + $0x1e8] sm:$0xff]
    %v102 = vld [vmem:[#allocation2 + $0x1f0] sm:$0xff]
    %v103 = vld [vmem:[#allocation2 + $0x1f8] sm:$0xff]
    %v104 = vld [vmem:[#allocation2 + $0x200] sm:$0xff]
    %v105 = vld [vmem:[#allocation2 + $0x208] sm:$0xff]
    %v106 = vld [vmem:[#allocation2 + $0x210] sm:$0xff]
    %v107 = vld [vmem:[#allocation2 + $0x218] sm:$0xff]
    %v108 = vld [vmem:[#allocation2 + $0x220] sm:$0xff]
    %v109 = vld [vmem:[#allocation2 + $0x228] sm:$0xff]
    %v110 = vld [vmem:[#allocation2 + $0x230] sm:$0xff]
    %v111 = vld [vmem:[#allocation2 + $0x238] sm:$0xff]
    %v112 = vld [vmem:[#allocation2 + $0x240] sm:$0xff]
    %v113 = vld [vmem:[#allocation2 + $0x248] sm:$0xff]
    %v114 = vld [vmem:[#allocation2 + $0x250] sm:$0xff]
    %v115 = vld [vmem:[#allocation2 + $0x258] sm:$0xff]
    %v116 = vld [vmem:[#allocation2 + $0x260] sm:$0xff]
    %v117 = vld [vmem:[#allocation2 + $0x268] sm:$0xff]
    %v118 = vld [vmem:[#allocation2 + $0x270] sm:$0xff]
    %v119 = vld [vmem:[#allocation2 + $0x278] sm:$0xff]
    %v120 = vld [vmem:[#allocation2 + $0x280] sm:$0xff]
    %v121 = vld [vmem:[#allocation2 + $0x288] sm:$0xff]
    %v122 = vld [vmem:[#allocation2 + $0x290] sm:$0xff]
    %v123 = vld [vmem:[#allocation2 + $0x298] sm:$0xff]
    %v124 = vld [vmem:[#allocation2 + $0x2a0] sm:$0xff]
    %v125 = vld [vmem:[#allocation2 + $0x2a8] sm:$0xff]
    %v126 = vld [vmem:[#allocation2 + $0x2b0] sm:$0xff]
    %v127 = vld [vmem:[#allocation2 + $0x2b8] sm:$0xff]
    %v128 = vld [vmem:[#allocation2 + $0x2c0] sm:$0xff]
    %v129 = vld [vmem:[#allocation2 + $0x2c8] sm:$0xff]
    %v130 = vld [vmem:[#allocation2 + $0x2d0] sm:$0xff]
    %v131 = vld [vmem:[#allocation2 + $0x2d8] sm:$0xff]
    %v132 = vld [vmem:[#allocation2 + $0x2e0] sm:$0xff]
    %v133 = vld [vmem:[#allocation2 + $0x2e8] sm:$0xff]
    %v134 = vld [vmem:[#allocation2 + $0x2f0] sm:$0xff]
    %v135 = vld [vmem:[#allocation2 + $0x2f8] sm:$0xff]
    %v136 = vld [vmem:[#allocation2 + $0x300] sm:$0xff]
    %v137 = vld [vmem:[#allocation2 + $0x308] sm:$0xff]
    %v138 = vld [vmem:[#allocation2 + $0x310] sm:$0xff]
    %v139 = vld [vmem:[#allocation2 + $0x318] sm:$0xff]
    %v140 = vld [vmem:[#allocation2 + $0x320] sm:$0xff]
    %v141 = vld [vmem:[#allocation2 + $0x328] sm:$0xff]
    %v142 = vld [vmem:[#allocation2 + $0x330] sm:$0xff]
    %v143 = vld [vmem:[#allocation2 + $0x338] sm:$0xff]
    %v144 = vld [vmem:[#allocation2 + $0x340] sm:$0xff]
    %v145 = vld [vmem:[#allocation2 + $0x348] sm:$0xff]
    %v146 = vld [vmem:[#allocation2 + $0x350] sm:$0xff]
    %v147 = vld [vmem:[#allocation2 + $0x358] sm:$0xff]
    %v148 = vld [vmem:[#allocation2 + $0x360] sm:$0xff]
    %v149 = vld [vmem:[#allocation2 + $0x368] sm:$0xff]
    %v150 = vld [vmem:[#allocation2 + $0x370] sm:$0xff]
    %v151 = vld [vmem:[#allocation2 + $0x378] sm:$0xff]
    %v152 = vld [vmem:[#allocation2 + $0x380] sm:$0xff]
    %v153 = vld [vmem:[#allocation2 + $0x388] sm:$0xff]
    %v154 = vld [vmem:[#allocation2 + $0x390] sm:$0xff]
    %v155 = vld [vmem:[#allocation2 + $0x398] sm:$0xff]
    %v156 = vld [vmem:[#allocation2 + $0x3a0] sm:$0xff]
    %v157 = vld [vmem:[#allocation2 + $0x3a8] sm:$0xff]
    %v158 = vld [vmem:[#allocation2 + $0x3b0] sm:$0xff]
    %v159 = vld [vmem:[#allocation2 + $0x3b8] sm:$0xff]
    %v160 = vld [vmem:[#allocation2 + $0x3c0] sm:$0xff]
    %v161 = vld [vmem:[#allocation2 + $0x3c8] sm:$0xff]
    %v162 = vld [vmem:[#allocation2 + $0x3d0] sm:$0xff]
    %v163 = vld [vmem:[#allocation2 + $0x3d8] sm:$0xff]
    %v164 = vld [vmem:[#allocation2 + $0x3e0] sm:$0xff]
    %v165 = vld [vmem:[#allocation2 + $0x3e8] sm:$0xff]
    %v166 = vld [vmem:[#allocation2 + $0x3f0] sm:$0xff]
    %v167 = vld [vmem:[#allocation2 + $0x3f8] sm:$0xff]
    %v168 = vld [vmem:[#allocation2 + $0x400] sm:$0xff]
    %v169 = vld [vmem:[#allocation2 + $0x408] sm:$0xff]
    %v170 = vld [vmem:[#allocation2 + $0x410] sm:$0xff]
    %v171 = vld [vmem:[#allocation2 + $0x418] sm:$0xff]
    %v172 = vld [vmem:[#allocation2 + $0x420] sm:$0xff]
    %v173 = vld [vmem:[#allocation2 + $0x428] sm:$0xff]
    %v174 = vld [vmem:[#allocation2 + $0x430] sm:$0xff]
    %v175 = vld [vmem:[#allocation2 + $0x438] sm:$0xff]
    %v176 = vld [vmem:[#allocation2 + $0x440] sm:$0xff]
    %v177 = vld [vmem:[#allocation2 + $0x448] sm:$0xff]
    %v178 = vld [vmem:[#allocation2 + $0x450] sm:$0xff]
    %v179 = vld [vmem:[#allocation2 + $0x458] sm:$0xff]
    %v180 = vld [vmem:[#allocation2 + $0x460] sm:$0xff]
    %v181 = vld [vmem:[#allocation2 + $0x468] sm:$0xff]
    %v182 = vld [vmem:[#allocation2 + $0x470] sm:$0xff]
    %v183 = vld [vmem:[#allocation2 + $0x478] sm:$0xff]
    %v184 = vld [vmem:[#allocation2 + $0x480] sm:$0xff]
    %v185 = vld [vmem:[#allocation2 + $0x488] sm:$0xff]
    %v186 = vld [vmem:[#allocation2 + $0x490] sm:$0xff]
    %v187 = vld [vmem:[#allocation2 + $0x498] sm:$0xff]
    %v188 = vld [vmem:[#allocation2 + $0x4a0] sm:$0xff]
    %v189 = vld [vmem:[#allocation2 + $0x4a8] sm:$0xff]
    %v190 = vld [vmem:[#allocation2 + $0x4b0] sm:$0xff]
    %v191 = vld [vmem:[#allocation2 + $0x4b8] sm:$0xff]
    %v192 = vld [vmem:[#allocation2 + $0x4c0] sm:$0xff]
    %v193 = vld [vmem:[#allocation2 + $0x4c8] sm:$0xff]
    %v194 = vld [vmem:[#allocation2 + $0x4d0] sm:$0xff]
    %v195 = vld [vmem:[#allocation2 + $0x4d8] sm:$0xff]
    %v196 = vld [vmem:[#allocation2 + $0x4e0] sm:$0xff]
    %v197 = vld [vmem:[#allocation2 + $0x4e8] sm:$0xff]
    %v198 = vld [vmem:[#allocation2 + $0x4f0] sm:$0xff]
    %v199 = vld [vmem:[#allocation2 + $0x4f8] sm:$0xff]
    %v200 = vld [vmem:[#allocation2 + $0x500] sm:$0xff]
    %v201 = vld [vmem:[#allocation2 + $0x508] sm:$0xff]
    %v202 = vld [vmem:[#allocation2 + $0x510] sm:$0xff]
    %v203 = vld [vmem:[#allocation2 + $0x518] sm:$0xff]
    %v204 = vld [vmem:[#allocation2 + $0x520] sm:$0xff]
    %v205 = vld [vmem:[#allocation2 + $0x528] sm:$0xff]
    %v206 = vld [vmem:[#allocation2 + $0x530] sm:$0xff]
    %v207 = vld [vmem:[#allocation2 + $0x538] sm:$0xff]
    %v208 = vld [vmem:[#allocation2 + $0x540] sm:$0xff]
    %v209 = vld [vmem:[#allocation2 + $0x548] sm:$0xff]
    %v210 = vld [vmem:[#allocation2 + $0x550] sm:$0xff]
    %v211 = vld [vmem:[#allocation2 + $0x558] sm:$0xff]
    %v212 = vld [vmem:[#allocation2 + $0x560] sm:$0xff]
    %v213 = vld [vmem:[#allocation2 + $0x568] sm:$0xff]
    %v214 = vld [vmem:[#allocation2 + $0x570] sm:$0xff]
    %v215 = vld [vmem:[#allocation2 + $0x578] sm:$0xff]
    %v216 = vld [vmem:[#allocation2 + $0x580] sm:$0xff]
    %v217 = vld [vmem:[#allocation2 + $0x588] sm:$0xff]
    %v218 = vld [vmem:[#allocation2 + $0x590] sm:$0xff]
    %v219 = vld [vmem:[#allocation2 + $0x598] sm:$0xff]
    %v220 = vld [vmem:[#allocation2 + $0x5a0] sm:$0xff]
    %v221 = vld [vmem:[#allocation2 + $0x5a8] sm:$0xff]
    %v222 = vld [vmem:[#allocation2 + $0x5b0] sm:$0xff]
    %v223 = vld [vmem:[#allocation2 + $0x5b8] sm:$0xff]
    %v224 = vld [vmem:[#allocation2 + $0x5c0] sm:$0xff]
    %v225 = vld [vmem:[#allocation2 + $0x5c8] sm:$0xff]
    %v226 = vld [vmem:[#allocation2 + $0x5d0] sm:$0xff]
    %v227 = vld [vmem:[#allocation2 + $0x5d8] sm:$0xff]
    %v228 = vld [vmem:[#allocation2 + $0x5e0] sm:$0xff]
    %v229 = vld [vmem:[#allocation2 + $0x5e8] sm:$0xff]
    %v230 = vld [vmem:[#allocation2 + $0x5f0] sm:$0xff]
    %v231 = vld [vmem:[#allocation2 + $0x5f8] sm:$0xff]
    %v232 = vld [vmem:[#allocation2 + $0x600] sm:$0xff]
    %v233 = vld [vmem:[#allocation2 + $0x608] sm:$0xff]
    %v234 = vld [vmem:[#allocation2 + $0x610] sm:$0xff]
    %v235 = vld [vmem:[#allocation2 + $0x618] sm:$0xff]
    %v236 = vld [vmem:[#allocation5] sm:$0xff]
    %v237 = vld [vmem:[#allocation5 + $0x8] sm:$0xff]
    %v238 = vld [vmem:[#allocation5 + $0x10] sm:$0xff]
    %v239 = vld [vmem:[#allocation5 + $0x18] sm:$0xff]
    %v240 = vld [vmem:[#allocation5 + $0x20] sm:$0xff]
    %v241 = vld [vmem:[#allocation5 + $0x28] sm:$0xff]
    %v242 = vld [vmem:[#allocation5 + $0x30] sm:$0xff]
    %v243 = vld [vmem:[#allocation5 + $0x38] sm:$0xff]
    %v244 = vld [vmem:[#allocation5 + $0x40] sm:$0xff]
    %v245 = vld [vmem:[#allocation5 + $0x48] sm:$0xff]
    %v246 = vld [vmem:[#allocation5 + $0x50] sm:$0xff]
    %v247 = vld [vmem:[#allocation5 + $0x58] sm:$0xff]
    %v248 = vld [vmem:[#allocation5 + $0x60] sm:$0xff]
    %v249 = vld [vmem:[#allocation5 + $0x68] sm:$0xff]
    %v250 = vld [vmem:[#allocation5 + $0x70] sm:$0xff]
    %v251 = vld [vmem:[#allocation5 + $0x78] sm:$0xff]
    %v252 = vld [vmem:[#allocation5 + $0x80] sm:$0xff]
    %v253 = vld [vmem:[#allocation5 + $0x88] sm:$0xff]
    %v254 = vld [vmem:[#allocation5 + $0x90] sm:$0xff]
    %v255 = vld [vmem:[#allocation5 + $0x98] sm:$0xff]
    %v256 = vld [vmem:[#allocation5 + $0xa0] sm:$0xff]
    %v257 = vld [vmem:[#allocation5 + $0xa8] sm:$0xff]
    %v258 = vld [vmem:[#allocation5 + $0xb0] sm:$0xff]
    %v259 = vld [vmem:[#allocation5 + $0xb8] sm:$0xff]
    %v260 = vld [vmem:[#allocation5 + $0xc0] sm:$0xff]
    %v261 = vld [vmem:[#allocation5 + $0xc8] sm:$0xff]
    %v262 = vld [vmem:[#allocation5 + $0xd0] sm:$0xff]
    %v263 = vld [vmem:[#allocation5 + $0xd8] sm:$0xff]
    %v264 = vld [vmem:[#allocation5 + $0xe0] sm:$0xff]
    %v265 = vld [vmem:[#allocation5 + $0xe8] sm:$0xff]
    %v266 = vld [vmem:[#allocation5 + $0xf0] sm:$0xff]
    %v267 = vld [vmem:[#allocation5 + $0xf8] sm:$0xff]
    %v268 = vld [vmem:[#allocation5 + $0x100] sm:$0xff]
    %v269 = vld [vmem:[#allocation5 + $0x108] sm:$0xff]
    %v270 = vld [vmem:[#allocation5 + $0x110] sm:$0xff]
    %v271 = vld [vmem:[#allocation5 + $0x118] sm:$0xff]
    %v272 = vld [vmem:[#allocation5 + $0x120] sm:$0xff]
    %v273 = vld [vmem:[#allocation5 + $0x128] sm:$0xff]
    %v274 = vld [vmem:[#allocation5 + $0x130] sm:$0xff]
    %v275 = vld [vmem:[#allocation5 + $0x138] sm:$0xff]
    %v276 = vld [vmem:[#allocation5 + $0x140] sm:$0xff]
    %v277 = vld [vmem:[#allocation5 + $0x148] sm:$0xff]
    %v278 = vld [vmem:[#allocation5 + $0x150] sm:$0xff]
    %v279 = vld [vmem:[#allocation5 + $0x158] sm:$0xff]
    %v280 = vld [vmem:[#allocation5 + $0x160] sm:$0xff]
    %v281 = vld [vmem:[#allocation5 + $0x168] sm:$0xff]
    %v282 = vld [vmem:[#allocation5 + $0x170] sm:$0xff]
    %v283 = vld [vmem:[#allocation5 + $0x178] sm:$0xff]
    %v284 = vld [vmem:[#allocation5 + $0x180] sm:$0xff]
    %v285 = vld [vmem:[#allocation5 + $0x188] sm:$0xff]
    %v286 = vld [vmem:[#allocation5 + $0x190] sm:$0xff]
    %v287 = vld [vmem:[#allocation5 + $0x198] sm:$0xff]
    %v288 = vld [vmem:[#allocation5 + $0x1a0] sm:$0xff]
    %v289 = vld [vmem:[#allocation5 + $0x1a8] sm:$0xff]
    %v290 = vld [vmem:[#allocation5 + $0x1b0] sm:$0xff]
    %v291 = vld [vmem:[#allocation5 + $0x1b8] sm:$0xff]
    %v292 = vld [vmem:[#allocation5 + $0x1c0] sm:$0xff]
    %v293 = vld [vmem:[#allocation5 + $0x1c8] sm:$0xff]
    %v294 = vld [vmem:[#allocation5 + $0x1d0] sm:$0xff]
    %v295 = vld [vmem:[#allocation5 + $0x1d8] sm:$0xff]
    %v296 = vld [vmem:[#allocation5 + $0x1e0] sm:$0xff]
    %v297 = vld [vmem:[#allocation5 + $0x1e8] sm:$0xff]
    %v298 = vld [vmem:[#allocation5 + $0x1f0] sm:$0xff]
    %v299 = vld [vmem:[#allocation5 + $0x1f8] sm:$0xff]
    %v300 = vld [vmem:[#allocation5 + $0x200] sm:$0xff]
    %v301 = vld [vmem:[#allocation5 + $0x208] sm:$0xff]
    %v302 = vld [vmem:[#allocation5 + $0x210] sm:$0xff]
    %v303 = vld [vmem:[#allocation5 + $0x218] sm:$0xff]
    %v304 = vld [vmem:[#allocation5 + $0x220] sm:$0xff]
    %v305 = vld [vmem:[#allocation5 + $0x228] sm:$0xff]
    %v306 = vld [vmem:[#allocation5 + $0x230] sm:$0xff]
    %v307 = vld [vmem:[#allocation5 + $0x238] sm:$0xff]
    %v308 = vld [vmem:[#allocation5 + $0x240] sm:$0xff]
    %v309 = vld [vmem:[#allocation5 + $0x248] sm:$0xff]
    %v310 = vld [vmem:[#allocation5 + $0x250] sm:$0xff]
    %v311 = vld [vmem:[#allocation5 + $0x258] sm:$0xff]
    %v312 = vld [vmem:[#allocation5 + $0x260] sm:$0xff]
    %v313 = vld [vmem:[#allocation5 + $0x268] sm:$0xff]
    %v314 = vld [vmem:[#allocation5 + $0x270] sm:$0xff]
    %v315 = vld [vmem:[#allocation5 + $0x278] sm:$0xff]
    %v316 = vld [vmem:[#allocation5 + $0x280] sm:$0xff]
    %v317 = vld [vmem:[#allocation5 + $0x288] sm:$0xff]
    %v318 = vld [vmem:[#allocation5 + $0x290] sm:$0xff]
    %v319 = vld [vmem:[#allocation5 + $0x298] sm:$0xff]
    %v320 = vld [vmem:[#allocation5 + $0x2a0] sm:$0xff]
    %v321 = vld [vmem:[#allocation5 + $0x2a8] sm:$0xff]
    %v322 = vld [vmem:[#allocation5 + $0x2b0] sm:$0xff]
    %v323 = vld [vmem:[#allocation5 + $0x2b8] sm:$0xff]
    %v324 = vld [vmem:[#allocation5 + $0x2c0] sm:$0xff]
    %v325 = vld [vmem:[#allocation5 + $0x2c8] sm:$0xff]
    %v326 = vld [vmem:[#allocation5 + $0x2d0] sm:$0xff]
    %v327 = vld [vmem:[#allocation5 + $0x2d8] sm:$0xff]
    %v328 = vld [vmem:[#allocation5 + $0x2e0] sm:$0xff]
    %v329 = vld [vmem:[#allocation5 + $0x2e8] sm:$0xff]
    %v330 = vld [vmem:[#allocation5 + $0x2f0] sm:$0xff]
    %v331 = vld [vmem:[#allocation5 + $0x2f8] sm:$0xff]
    %v332 = vld [vmem:[#allocation5 + $0x300] sm:$0xff]
    %v333 = vld [vmem:[#allocation5 + $0x308] sm:$0xff]
    %v334 = vld [vmem:[#allocation5 + $0x310] sm:$0xff]
    %v335 = vld [vmem:[#allocation5 + $0x318] sm:$0xff]
    %v336 = vld [vmem:[#allocation5 + $0x320] sm:$0xff]
    %v337 = vld [vmem:[#allocation5 + $0x328] sm:$0xff]
    %v338 = vld [vmem:[#allocation5 + $0x330] sm:$0xff]
    %v339 = vld [vmem:[#allocation5 + $0x338] sm:$0xff]
    %v340 = vld [vmem:[#allocation5 + $0x340] sm:$0xff]
    %v341 = vld [vmem:[#allocation5 + $0x348] sm:$0xff]
    %v342 = vld [vmem:[#allocation5 + $0x350] sm:$0xff]
    %v343 = vld [vmem:[#allocation5 + $0x358] sm:$0xff]
    %v344 = vld [vmem:[#allocation5 + $0x360] sm:$0xff]
    %v345 = vld [vmem:[#allocation5 + $0x368] sm:$0xff]
    %v346 = vld [vmem:[#allocation5 + $0x370] sm:$0xff]
    %v347 = vld [vmem:[#allocation5 + $0x378] sm:$0xff]
    %v348 = vld [vmem:[#allocation5 + $0x380] sm:$0xff]
    %v349 = vld [vmem:[#allocation5 + $0x388] sm:$0xff]
    %v350 = vld [vmem:[#allocation5 + $0x390] sm:$0xff]
    %v351 = vld [vmem:[#allocation5 + $0x398] sm:$0xff]
    %v352 = vld [vmem:[#allocation5 + $0x3a0] sm:$0xff]
    %v353 = vld [vmem:[#allocation5 + $0x3a8] sm:$0xff]
    %v354 = vld [vmem:[#allocation5 + $0x3b0] sm:$0xff]
    %v355 = vld [vmem:[#allocation5 + $0x3b8] sm:$0xff]
    %v356 = vld [vmem:[#allocation5 + $0x3c0] sm:$0xff]
    %v357 = vld [vmem:[#allocation5 + $0x3c8] sm:$0xff]
    %v358 = vld [vmem:[#allocation5 + $0x3d0] sm:$0xff]
    %v359 = vld [vmem:[#allocation5 + $0x3d8] sm:$0xff]
    %v360 = vld [vmem:[#allocation5 + $0x3e0] sm:$0xff]
    %v361 = vld [vmem:[#allocation5 + $0x3e8] sm:$0xff]
    %v362 = vld [vmem:[#allocation5 + $0x3f0] sm:$0xff]
    %v363 = vld [vmem:[#allocation5 + $0x3f8] sm:$0xff]
    %v364 = vld [vmem:[#allocation5 + $0x400] sm:$0xff]
    %v365 = vld [vmem:[#allocation5 + $0x408] sm:$0xff]
    %v366 = vld [vmem:[#allocation5 + $0x410] sm:$0xff]
    %v367 = vld [vmem:[#allocation5 + $0x418] sm:$0xff]
    %v368 = vld [vmem:[#allocation5 + $0x420] sm:$0xff]
    %v369 = vld [vmem:[#allocation5 + $0x428] sm:$0xff]
    %v370 = vld [vmem:[#allocation5 + $0x430] sm:$0xff]
    %v371 = vld [vmem:[#allocation5 + $0x438] sm:$0xff]
    %v372 = vld [vmem:[#allocation5 + $0x440] sm:$0xff]
    %v373 = vld [vmem:[#allocation5 + $0x448] sm:$0xff]
    %v374 = vld [vmem:[#allocation5 + $0x450] sm:$0xff]
    %v375 = vld [vmem:[#allocation5 + $0x458] sm:$0xff]
    %v376 = vld [vmem:[#allocation5 + $0x460] sm:$0xff]
    %v377 = vld [vmem:[#allocation5 + $0x468] sm:$0xff]
    %v378 = vld [vmem:[#allocation5 + $0x470] sm:$0xff]
    %v379 = vld [vmem:[#allocation5 + $0x478] sm:$0xff]
    %v380 = vld [vmem:[#allocation5 + $0x480] sm:$0xff]
    %v381 = vld [vmem:[#allocation5 + $0x488] sm:$0xff]
    %v382 = vld [vmem:[#allocation5 + $0x490] sm:$0xff]
    %v383 = vld [vmem:[#allocation5 + $0x498] sm:$0xff]
    %v384 = vld [vmem:[#allocation5 + $0x4a0] sm:$0xff]
    %v385 = vld [vmem:[#allocation5 + $0x4a8] sm:$0xff]
    %v386 = vld [vmem:[#allocation5 + $0x4b0] sm:$0xff]
    %v387 = vld [vmem:[#allocation5 + $0x4b8] sm:$0xff]
    %v388 = vld [vmem:[#allocation5 + $0x4c0] sm:$0xff]
    %v389 = vld [vmem:[#allocation5 + $0x4c8] sm:$0xff]
    %v390 = vld [vmem:[#allocation5 + $0x4d0] sm:$0xff]
    %v391 = vld [vmem:[#allocation5 + $0x4d8] sm:$0xff]
    %v392 = vld [vmem:[#allocation5 + $0x4e0] sm:$0xff]
    %v393 = vld [vmem:[#allocation5 + $0x4e8] sm:$0xff]
    %v394 = vld [vmem:[#allocation5 + $0x4f0] sm:$0xff]
    %v395 = vld [vmem:[#allocation5 + $0x4f8] sm:$0xff]
    %v396 = vld [vmem:[#allocation5 + $0x500] sm:$0xff]
    %v397 = vld [vmem:[#allocation5 + $0x508] sm:$0xff]
    %v398 = vld [vmem:[#allocation5 + $0x510] sm:$0xff]
    %v399 = vld [vmem:[#allocation5 + $0x518] sm:$0xff]
    %v400 = vld [vmem:[#allocation5 + $0x520] sm:$0xff]
    %v401 = vld [vmem:[#allocation5 + $0x528] sm:$0xff]
    %v402 = vld [vmem:[#allocation5 + $0x530] sm:$0xff]
    %v403 = vld [vmem:[#allocation5 + $0x538] sm:$0xff]
    %v404 = vld [vmem:[#allocation5 + $0x540] sm:$0xff]
    %v405 = vld [vmem:[#allocation5 + $0x548] sm:$0xff]
    %v406 = vld [vmem:[#allocation5 + $0x550] sm:$0xff]
    %v407 = vld [vmem:[#allocation5 + $0x558] sm:$0xff]
    %v408 = vld [vmem:[#allocation5 + $0x560] sm:$0xff]
    %v409 = vld [vmem:[#allocation5 + $0x568] sm:$0xff]
    %v410 = vld [vmem:[#allocation5 + $0x570] sm:$0xff]
    %v411 = vld [vmem:[#allocation5 + $0x578] sm:$0xff]
    %v412 = vld [vmem:[#allocation5 + $0x580] sm:$0xff]
    %v413 = vld [vmem:[#allocation5 + $0x588] sm:$0xff]
    %v414 = vld [vmem:[#allocation5 + $0x590] sm:$0xff]
    %v415 = vld [vmem:[#allocation5 + $0x598] sm:$0xff]
    %v416 = vld [vmem:[#allocation5 + $0x5a0] sm:$0xff]
    %v417 = vld [vmem:[#allocation5 + $0x5a8] sm:$0xff]
    %v418 = vld [vmem:[#allocation5 + $0x5b0] sm:$0xff]
    %v419 = vld [vmem:[#allocation5 + $0x5b8] sm:$0xff]
    %v420 = vld [vmem:[#allocation5 + $0x5c0] sm:$0xff]
    %v421 = vld [vmem:[#allocation5 + $0x5c8] sm:$0xff]
    %v422 = vld [vmem:[#allocation5 + $0x5d0] sm:$0xff]
    %v423 = vld [vmem:[#allocation5 + $0x5d8] sm:$0xff]
    %v424 = vld [vmem:[#allocation5 + $0x5e0] sm:$0xff]
    %v425 = vld [vmem:[#allocation5 + $0x5e8] sm:$0xff]
    %v426 = vld [vmem:[#allocation5 + $0x5f0] sm:$0xff]
    %v427 = vld [vmem:[#allocation5 + $0x5f8] sm:$0xff]
    %v428 = vld [vmem:[#allocation5 + $0x600] sm:$0xff]
    %v429 = vld [vmem:[#allocation5 + $0x608] sm:$0xff]
    %v430 = vld [vmem:[#allocation5 + $0x610] sm:$0xff]
    %v431 = vld [vmem:[#allocation5 + $0x618] sm:$0xff]
    %v432 = vadd.f32 %v40, %v236
    %v433 = vadd.f32 %v41, %v237
    %v434 = vadd.f32 %v42, %v238
    %v435 = vadd.f32 %v43, %v239
    %v436 = vadd.f32 %v44, %v240
    %v437 = vadd.f32 %v45, %v241
    %v438 = vadd.f32 %v46, %v242
    %v439 = vadd.f32 %v47, %v243
    %v440 = vadd.f32 %v48, %v244
    %v441 = vadd.f32 %v49, %v245
    %v442 = vadd.f32 %v50, %v246
    %v443 = vadd.f32 %v51, %v247
    %v444 = vadd.f32 %v52, %v248
    %v445 = vadd.f32 %v53, %v249
    %v446 = vadd.f32 %v54, %v250
    %v447 = vadd.f32 %v55, %v251
    %v448 = vadd.f32 %v56, %v252
    %v449 = vadd.f32 %v57, %v253
    %v450 = vadd.f32 %v58, %v254
    %v451 = vadd.f32 %v59, %v255
    %v452 = vadd.f32 %v60, %v256
    %v453 = vadd.f32 %v61, %v257
    %v454 = vadd.f32 %v62, %v258
    %v455 = vadd.f32 %v63, %v259
    %v456 = vadd.f32 %v64, %v260
    %v457 = vadd.f32 %v65, %v261
    %v458 = vadd.f32 %v66, %v262
    %v459 = vadd.f32 %v67, %v263
    %v460 = vadd.f32 %v68, %v264
    %v461 = vadd.f32 %v69, %v265
    %v462 = vadd.f32 %v70, %v266
    %v463 = vadd.f32 %v71, %v267
    %v464 = vadd.f32 %v72, %v268
    %v465 = vadd.f32 %v73, %v269
    %v466 = vadd.f32 %v74, %v270
    %v467 = vadd.f32 %v75, %v271
    %v468 = vadd.f32 %v76, %v272
    %v469 = vadd.f32 %v77, %v273
    %v470 = vadd.f32 %v78, %v274
    %v471 = vadd.f32 %v79, %v275
    %v472 = vadd.f32 %v80, %v276
    %v473 = vadd.f32 %v81, %v277
    %v474 = vadd.f32 %v82, %v278
    %v475 = vadd.f32 %v83, %v279
    %v476 = vadd.f32 %v84, %v280
    %v477 = vadd.f32 %v85, %v281
    %v478 = vadd.f32 %v86, %v282
    %v479 = vadd.f32 %v87, %v283
    %v480 = vadd.f32 %v88, %v284
    %v481 = vadd.f32 %v89, %v285
    %v482 = vadd.f32 %v90, %v286
    %v483 = vadd.f32 %v91, %v287
    %v484 = vadd.f32 %v92, %v288
    %v485 = vadd.f32 %v93, %v289
    %v486 = vadd.f32 %v94, %v290
    %v487 = vadd.f32 %v95, %v291
    %v488 = vadd.f32 %v96, %v292
    %v489 = vadd.f32 %v97, %v293
    %v490 = vadd.f32 %v98, %v294
    %v491 = vadd.f32 %v99, %v295
    %v492 = vadd.f32 %v100, %v296
    %v493 = vadd.f32 %v101, %v297
    %v494 = vadd.f32 %v102, %v298
    %v495 = vadd.f32 %v103, %v299
    %v496 = vadd.f32 %v104, %v300
    %v497 = vadd.f32 %v105, %v301
    %v498 = vadd.f32 %v106, %v302
    %v499 = vadd.f32 %v107, %v303
    %v500 = vadd.f32 %v108, %v304
    %v501 = vadd.f32 %v109, %v305
    %v502 = vadd.f32 %v110, %v306
    %v503 = vadd.f32 %v111, %v307
    %v504 = vadd.f32 %v112, %v308
    %v505 = vadd.f32 %v113, %v309
    %v506 = vadd.f32 %v114, %v310
    %v507 = vadd.f32 %v115, %v311
    %v508 = vadd.f32 %v116, %v312
    %v509 = vadd.f32 %v117, %v313
    %v510 = vadd.f32 %v118, %v314
    %v511 = vadd.f32 %v119, %v315
    %v512 = vadd.f32 %v120, %v316
    %v513 = vadd.f32 %v121, %v317
    %v514 = vadd.f32 %v122, %v318
    %v515 = vadd.f32 %v123, %v319
    %v516 = vadd.f32 %v124, %v320
    %v517 = vadd.f32 %v125, %v321
    %v518 = vadd.f32 %v126, %v322
    %v519 = vadd.f32 %v127, %v323
    %v520 = vadd.f32 %v128, %v324
    %v521 = vadd.f32 %v129, %v325
    %v522 = vadd.f32 %v130, %v326
    %v523 = vadd.f32 %v131, %v327
    %v524 = vadd.f32 %v132, %v328
    %v525 = vadd.f32 %v133, %v329
    %v526 = vadd.f32 %v134, %v330
    %v527 = vadd.f32 %v135, %v331
    %v528 = vadd.f32 %v136, %v332
    %v529 = vadd.f32 %v137, %v333
    %v530 = vadd.f32 %v138, %v334
    %v531 = vadd.f32 %v139, %v335
    %v532 = vadd.f32 %v140, %v336
    %v533 = vadd.f32 %v141, %v337
    %v534 = vadd.f32 %v142, %v338
    %v535 = vadd.f32 %v143, %v339
    %v536 = vadd.f32 %v144, %v340
    %v537 = vadd.f32 %v145, %v341
    %v538 = vadd.f32 %v146, %v342
    %v539 = vadd.f32 %v147, %v343
    %v540 = vadd.f32 %v148, %v344
    %v541 = vadd.f32 %v149, %v345
    %v542 = vadd.f32 %v150, %v346
    %v543 = vadd.f32 %v151, %v347
    %v544 = vadd.f32 %v152, %v348
    %v545 = vadd.f32 %v153, %v349
    %v546 = vadd.f32 %v154, %v350
    %v547 = vadd.f32 %v155, %v351
    %v548 = vadd.f32 %v156, %v352
    %v549 = vadd.f32 %v157, %v353
    %v550 = vadd.f32 %v158, %v354
    %v551 = vadd.f32 %v159, %v355
    %v552 = vadd.f32 %v160, %v356
    %v553 = vadd.f32 %v161, %v357
    %v554 = vadd.f32 %v162, %v358
    %v555 = vadd.f32 %v163, %v359
    %v556 = vadd.f32 %v164, %v360
    %v557 = vadd.f32 %v165, %v361
    %v558 = vadd.f32 %v166, %v362
    %v559 = vadd.f32 %v167, %v363
    %v560 = vadd.f32 %v168, %v364
    %v561 = vadd.f32 %v169, %v365
    %v562 = vadd.f32 %v170, %v366
    %v563 = vadd.f32 %v171, %v367
    %v564 = vadd.f32 %v172, %v368
    %v565 = vadd.f32 %v173, %v369
    %v566 = vadd.f32 %v174, %v370
    %v567 = vadd.f32 %v175, %v371
    %v568 = vadd.f32 %v176, %v372
    %v569 = vadd.f32 %v177, %v373
    %v570 = vadd.f32 %v178, %v374
    %v571 = vadd.f32 %v179, %v375
    %v572 = vadd.f32 %v180, %v376
    %v573 = vadd.f32 %v181, %v377
    %v574 = vadd.f32 %v182, %v378
    %v575 = vadd.f32 %v183, %v379
    %v576 = vadd.f32 %v184, %v380
    %v577 = vadd.f32 %v185, %v381
    %v578 = vadd.f32 %v186, %v382
    %v579 = vadd.f32 %v187, %v383
    %v580 = vadd.f32 %v188, %v384
    %v581 = vadd.f32 %v189, %v385
    %v582 = vadd.f32 %v190, %v386
    %v583 = vadd.f32 %v191, %v387
    %v584 = vadd.f32 %v192, %v388
    %v585 = vadd.f32 %v193, %v389
    %v586 = vadd.f32 %v194, %v390
    %v587 = vadd.f32 %v195, %v391
    %v588 = vadd.f32 %v196, %v392
    %v589 = vadd.f32 %v197, %v393
    %v590 = vadd.f32 %v198, %v394
    %v591 = vadd.f32 %v199, %v395
    %v592 = vadd.f32 %v200, %v396
    %v593 = vadd.f32 %v201, %v397
    %v594 = vadd.f32 %v202, %v398
    %v595 = vadd.f32 %v203, %v399
    %v596 = vadd.f32 %v204, %v400
    %v597 = vadd.f32 %v205, %v401
    %v598 = vadd.f32 %v206, %v402
    %v599 = vadd.f32 %v207, %v403
    %v600 = vadd.f32 %v208, %v404
    %v601 = vadd.f32 %v209, %v405
    %v602 = vadd.f32 %v210, %v406
    %v603 = vadd.f32 %v211, %v407
    %v604 = vadd.f32 %v212, %v408
    %v605 = vadd.f32 %v213, %v409
    %v606 = vadd.f32 %v214, %v410
    %v607 = vadd.f32 %v215, %v411
    %v608 = vadd.f32 %v216, %v412
    %v609 = vadd.f32 %v217, %v413
    %v610 = vadd.f32 %v218, %v414
    %v611 = vadd.f32 %v219, %v415
    %v612 = vadd.f32 %v220, %v416
    %v613 = vadd.f32 %v221, %v417
    %v614 = vadd.f32 %v222, %v418
    %v615 = vadd.f32 %v223, %v419
    %v616 = vadd.f32 %v224, %v420
    %v617 = vadd.f32 %v225, %v421
    %v618 = vadd.f32 %v226, %v422
    %v619 = vadd.f32 %v227, %v423
    %v620 = vadd.f32 %v228, %v424
    %v621 = vadd.f32 %v229, %v425
    %v622 = vadd.f32 %v230, %v426
    %v623 = vadd.f32 %v231, %v427
    %v624 = vadd.f32 %v232, %v428
    %v625 = vadd.f32 %v233, %v429
    %v626 = vadd.f32 %v234, %v430
    %v627 = vadd.f32 %v235, %v431
    %628 = vst [vmem:[#allocation7] sm:$0xff] %v432
    %629 = vst [vmem:[#allocation7 + $0x8] sm:$0xff] %v433
    %630 = vst [vmem:[#allocation7 + $0x10] sm:$0xff] %v434
    %631 = vst [vmem:[#allocation7 + $0x18] sm:$0xff] %v435
    %632 = vst [vmem:[#allocation7 + $0x20] sm:$0xff] %v436
    %633 = vst [vmem:[#allocation7 + $0x28] sm:$0xff] %v437
    %634 = vst [vmem:[#allocation7 + $0x30] sm:$0xff] %v438
    %635 = vst [vmem:[#allocation7 + $0x38] sm:$0xff] %v439
    %636 = vst [vmem:[#allocation7 + $0x40] sm:$0xff] %v440
    %637 = vst [vmem:[#allocation7 + $0x48] sm:$0xff] %v441
    %638 = vst [vmem:[#allocation7 + $0x50] sm:$0xff] %v442
    %639 = vst [vmem:[#allocation7 + $0x58] sm:$0xff] %v443
    %640 = vst [vmem:[#allocation7 + $0x60] sm:$0xff] %v444
    %641 = vst [vmem:[#allocation7 + $0x68] sm:$0xff] %v445
    %642 = vst [vmem:[#allocation7 + $0x70] sm:$0xff] %v446
    %643 = vst [vmem:[#allocation7 + $0x78] sm:$0xff] %v447
    %644 = vst [vmem:[#allocation7 + $0x80] sm:$0xff] %v448
    %645 = vst [vmem:[#allocation7 + $0x88] sm:$0xff] %v449
    %646 = vst [vmem:[#allocation7 + $0x90] sm:$0xff] %v450
    %647 = vst [vmem:[#allocation7 + $0x98] sm:$0xff] %v451
    %648 = vst [vmem:[#allocation7 + $0xa0] sm:$0xff] %v452
    %649 = vst [vmem:[#allocation7 + $0xa8] sm:$0xff] %v453
    %650 = vst [vmem:[#allocation7 + $0xb0] sm:$0xff] %v454
    %651 = vst [vmem:[#allocation7 + $0xb8] sm:$0xff] %v455
    %652 = vst [vmem:[#allocation7 + $0xc0] sm:$0xff] %v456
    %653 = vst [vmem:[#allocation7 + $0xc8] sm:$0xff] %v457
    %654 = vst [vmem:[#allocation7 + $0xd0] sm:$0xff] %v458
    %655 = vst [vmem:[#allocation7 + $0xd8] sm:$0xff] %v459
    %656 = vst [vmem:[#allocation7 + $0xe0] sm:$0xff] %v460
    %657 = vst [vmem:[#allocation7 + $0xe8] sm:$0xff] %v461
    %658 = vst [vmem:[#allocation7 + $0xf0] sm:$0xff] %v462
    %659 = vst [vmem:[#allocation7 + $0xf8] sm:$0xff] %v463
    %660 = vst [vmem:[#allocation7 + $0x100] sm:$0xff] %v464
    %661 = vst [vmem:[#allocation7 + $0x108] sm:$0xff] %v465
    %662 = vst [vmem:[#allocation7 + $0x110] sm:$0xff] %v466
    %663 = vst [vmem:[#allocation7 + $0x118] sm:$0xff] %v467
    %664 = vst [vmem:[#allocation7 + $0x120] sm:$0xff] %v468
    %665 = vst [vmem:[#allocation7 + $0x128] sm:$0xff] %v469
    %666 = vst [vmem:[#allocation7 + $0x130] sm:$0xff] %v470
    %667 = vst [vmem:[#allocation7 + $0x138] sm:$0xff] %v471
    %668 = vst [vmem:[#allocation7 + $0x140] sm:$0xff] %v472
    %669 = vst [vmem:[#allocation7 + $0x148] sm:$0xff] %v473
    %670 = vst [vmem:[#allocation7 + $0x150] sm:$0xff] %v474
    %671 = vst [vmem:[#allocation7 + $0x158] sm:$0xff] %v475
    %672 = vst [vmem:[#allocation7 + $0x160] sm:$0xff] %v476
    %673 = vst [vmem:[#allocation7 + $0x168] sm:$0xff] %v477
    %674 = vst [vmem:[#allocation7 + $0x170] sm:$0xff] %v478
    %675 = vst [vmem:[#allocation7 + $0x178] sm:$0xff] %v479
    %676 = vst [vmem:[#allocation7 + $0x180] sm:$0xff] %v480
    %677 = vst [vmem:[#allocation7 + $0x188] sm:$0xff] %v481
    %678 = vst [vmem:[#allocation7 + $0x190] sm:$0xff] %v482
    %679 = vst [vmem:[#allocation7 + $0x198] sm:$0xff] %v483
    %680 = vst [vmem:[#allocation7 + $0x1a0] sm:$0xff] %v484
    %681 = vst [vmem:[#allocation7 + $0x1a8] sm:$0xff] %v485
    %682 = vst [vmem:[#allocation7 + $0x1b0] sm:$0xff] %v486
    %683 = vst [vmem:[#allocation7 + $0x1b8] sm:$0xff] %v487
    %684 = vst [vmem:[#allocation7 + $0x1c0] sm:$0xff] %v488
    %685 = vst [vmem:[#allocation7 + $0x1c8] sm:$0xff] %v489
    %686 = vst [vmem:[#allocation7 + $0x1d0] sm:$0xff] %v490
    %687 = vst [vmem:[#allocation7 + $0x1d8] sm:$0xff] %v491
    %688 = vst [vmem:[#allocation7 + $0x1e0] sm:$0xff] %v492
    %689 = vst [vmem:[#allocation7 + $0x1e8] sm:$0xff] %v493
    %690 = vst [vmem:[#allocation7 + $0x1f0] sm:$0xff] %v494
    %691 = vst [vmem:[#allocation7 + $0x1f8] sm:$0xff] %v495
    %692 = vst [vmem:[#allocation7 + $0x200] sm:$0xff] %v496
    %693 = vst [vmem:[#allocation7 + $0x208] sm:$0xff] %v497
    %694 = vst [vmem:[#allocation7 + $0x210] sm:$0xff] %v498
    %695 = vst [vmem:[#allocation7 + $0x218] sm:$0xff] %v499
    %696 = vst [vmem:[#allocation7 + $0x220] sm:$0xff] %v500
    %697 = vst [vmem:[#allocation7 + $0x228] sm:$0xff] %v501
    %698 = vst [vmem:[#allocation7 + $0x230] sm:$0xff] %v502
    %699 = vst [vmem:[#allocation7 + $0x238] sm:$0xff] %v503
    %700 = vst [vmem:[#allocation7 + $0x240] sm:$0xff] %v504
    %701 = vst [vmem:[#allocation7 + $0x248] sm:$0xff] %v505
    %702 = vst [vmem:[#allocation7 + $0x250] sm:$0xff] %v506
    %703 = vst [vmem:[#allocation7 + $0x258] sm:$0xff] %v507
    %704 = vst [vmem:[#allocation7 + $0x260] sm:$0xff] %v508
    %705 = vst [vmem:[#allocation7 + $0x268] sm:$0xff] %v509
    %706 = vst [vmem:[#allocation7 + $0x270] sm:$0xff] %v510
    %707 = vst [vmem:[#allocation7 + $0x278] sm:$0xff] %v511
    %708 = vst [vmem:[#allocation7 + $0x280] sm:$0xff] %v512
    %709 = vst [vmem:[#allocation7 + $0x288] sm:$0xff] %v513
    %710 = vst [vmem:[#allocation7 + $0x290] sm:$0xff] %v514
    %711 = vst [vmem:[#allocation7 + $0x298] sm:$0xff] %v515
    %712 = vst [vmem:[#allocation7 + $0x2a0] sm:$0xff] %v516
    %713 = vst [vmem:[#allocation7 + $0x2a8] sm:$0xff] %v517
    %714 = vst [vmem:[#allocation7 + $0x2b0] sm:$0xff] %v518
    %715 = vst [vmem:[#allocation7 + $0x2b8] sm:$0xff] %v519
    %716 = vst [vmem:[#allocation7 + $0x2c0] sm:$0xff] %v520
    %717 = vst [vmem:[#allocation7 + $0x2c8] sm:$0xff] %v521
    %718 = vst [vmem:[#allocation7 + $0x2d0] sm:$0xff] %v522
    %719 = vst [vmem:[#allocation7 + $0x2d8] sm:$0xff] %v523
    %720 = vst [vmem:[#allocation7 + $0x2e0] sm:$0xff] %v524
    %721 = vst [vmem:[#allocation7 + $0x2e8] sm:$0xff] %v525
    %722 = vst [vmem:[#allocation7 + $0x2f0] sm:$0xff] %v526
    %723 = vst [vmem:[#allocation7 + $0x2f8] sm:$0xff] %v527
    %724 = vst [vmem:[#allocation7 + $0x300] sm:$0xff] %v528
    %725 = vst [vmem:[#allocation7 + $0x308] sm:$0xff] %v529
    %726 = vst [vmem:[#allocation7 + $0x310] sm:$0xff] %v530
    %727 = vst [vmem:[#allocation7 + $0x318] sm:$0xff] %v531
    %728 = vst [vmem:[#allocation7 + $0x320] sm:$0xff] %v532
    %729 = vst [vmem:[#allocation7 + $0x328] sm:$0xff] %v533
    %730 = vst [vmem:[#allocation7 + $0x330] sm:$0xff] %v534
    %731 = vst [vmem:[#allocation7 + $0x338] sm:$0xff] %v535
    %732 = vst [vmem:[#allocation7 + $0x340] sm:$0xff] %v536
    %733 = vst [vmem:[#allocation7 + $0x348] sm:$0xff] %v537
    %734 = vst [vmem:[#allocation7 + $0x350] sm:$0xff] %v538
    %735 = vst [vmem:[#allocation7 + $0x358] sm:$0xff] %v539
    %736 = vst [vmem:[#allocation7 + $0x360] sm:$0xff] %v540
    %737 = vst [vmem:[#allocation7 + $0x368] sm:$0xff] %v541
    %738 = vst [vmem:[#allocation7 + $0x370] sm:$0xff] %v542
    %739 = vst [vmem:[#allocation7 + $0x378] sm:$0xff] %v543
    %740 = vst [vmem:[#allocation7 + $0x380] sm:$0xff] %v544
    %741 = vst [vmem:[#allocation7 + $0x388] sm:$0xff] %v545
    %742 = vst [vmem:[#allocation7 + $0x390] sm:$0xff] %v546
    %743 = vst [vmem:[#allocation7 + $0x398] sm:$0xff] %v547
    %744 = vst [vmem:[#allocation7 + $0x3a0] sm:$0xff] %v548
    %745 = vst [vmem:[#allocation7 + $0x3a8] sm:$0xff] %v549
    %746 = vst [vmem:[#allocation7 + $0x3b0] sm:$0xff] %v550
    %747 = vst [vmem:[#allocation7 + $0x3b8] sm:$0xff] %v551
    %748 = vst [vmem:[#allocation7 + $0x3c0] sm:$0xff] %v552
    %749 = vst [vmem:[#allocation7 + $0x3c8] sm:$0xff] %v553
    %750 = vst [vmem:[#allocation7 + $0x3d0] sm:$0xff] %v554
    %751 = vst [vmem:[#allocation7 + $0x3d8] sm:$0xff] %v555
    %752 = vst [vmem:[#allocation7 + $0x3e0] sm:$0xff] %v556
    %753 = vst [vmem:[#allocation7 + $0x3e8] sm:$0xff] %v557
    %754 = vst [vmem:[#allocation7 + $0x3f0] sm:$0xff] %v558
    %755 = vst [vmem:[#allocation7 + $0x3f8] sm:$0xff] %v559
    %756 = vst [vmem:[#allocation7 + $0x400] sm:$0xff] %v560
    %757 = vst [vmem:[#allocation7 + $0x408] sm:$0xff] %v561
    %758 = vst [vmem:[#allocation7 + $0x410] sm:$0xff] %v562
    %759 = vst [vmem:[#allocation7 + $0x418] sm:$0xff] %v563
    %760 = vst [vmem:[#allocation7 + $0x420] sm:$0xff] %v564
    %761 = vst [vmem:[#allocation7 + $0x428] sm:$0xff] %v565
    %762 = vst [vmem:[#allocation7 + $0x430] sm:$0xff] %v566
    %763 = vst [vmem:[#allocation7 + $0x438] sm:$0xff] %v567
    %764 = vst [vmem:[#allocation7 + $0x440] sm:$0xff] %v568
    %765 = vst [vmem:[#allocation7 + $0x448] sm:$0xff] %v569
    %766 = vst [vmem:[#allocation7 + $0x450] sm:$0xff] %v570
    %767 = vst [vmem:[#allocation7 + $0x458] sm:$0xff] %v571
    %768 = vst [vmem:[#allocation7 + $0x460] sm:$0xff] %v572
    %769 = vst [vmem:[#allocation7 + $0x468] sm:$0xff] %v573
    %770 = vst [vmem:[#allocation7 + $0x470] sm:$0xff] %v574
    %771 = vst [vmem:[#allocation7 + $0x478] sm:$0xff] %v575
    %772 = vst [vmem:[#allocation7 + $0x480] sm:$0xff] %v576
    %773 = vst [vmem:[#allocation7 + $0x488] sm:$0xff] %v577
    %774 = vst [vmem:[#allocation7 + $0x490] sm:$0xff] %v578
    %775 = vst [vmem:[#allocation7 + $0x498] sm:$0xff] %v579
    %776 = vst [vmem:[#allocation7 + $0x4a0] sm:$0xff] %v580
    %777 = vst [vmem:[#allocation7 + $0x4a8] sm:$0xff] %v581
    %778 = vst [vmem:[#allocation7 + $0x4b0] sm:$0xff] %v582
    %779 = vst [vmem:[#allocation7 + $0x4b8] sm:$0xff] %v583
    %780 = vst [vmem:[#allocation7 + $0x4c0] sm:$0xff] %v584
    %781 = vst [vmem:[#allocation7 + $0x4c8] sm:$0xff] %v585
    %782 = vst [vmem:[#allocation7 + $0x4d0] sm:$0xff] %v586
    %783 = vst [vmem:[#allocation7 + $0x4d8] sm:$0xff] %v587
    %784 = vst [vmem:[#allocation7 + $0x4e0] sm:$0xff] %v588
    %785 = vst [vmem:[#allocation7 + $0x4e8] sm:$0xff] %v589
    %786 = vst [vmem:[#allocation7 + $0x4f0] sm:$0xff] %v590
    %787 = vst [vmem:[#allocation7 + $0x4f8] sm:$0xff] %v591
    %788 = vst [vmem:[#allocation7 + $0x500] sm:$0xff] %v592
    %789 = vst [vmem:[#allocation7 + $0x508] sm:$0xff] %v593
    %790 = vst [vmem:[#allocation7 + $0x510] sm:$0xff] %v594
    %791 = vst [vmem:[#allocation7 + $0x518] sm:$0xff] %v595
    %792 = vst [vmem:[#allocation7 + $0x520] sm:$0xff] %v596
    %793 = vst [vmem:[#allocation7 + $0x528] sm:$0xff] %v597
    %794 = vst [vmem:[#allocation7 + $0x530] sm:$0xff] %v598
    %795 = vst [vmem:[#allocation7 + $0x538] sm:$0xff] %v599
    %796 = vst [vmem:[#allocation7 + $0x540] sm:$0xff] %v600
    %797 = vst [vmem:[#allocation7 + $0x548] sm:$0xff] %v601
    %798 = vst [vmem:[#allocation7 + $0x550] sm:$0xff] %v602
    %799 = vst [vmem:[#allocation7 + $0x558] sm:$0xff] %v603
    %800 = vst [vmem:[#allocation7 + $0x560] sm:$0xff] %v604
    %801 = vst [vmem:[#allocation7 + $0x568] sm:$0xff] %v605
    %802 = vst [vmem:[#allocation7 + $0x570] sm:$0xff] %v606
    %803 = vst [vmem:[#allocation7 + $0x578] sm:$0xff] %v607
    %804 = vst [vmem:[#allocation7 + $0x580] sm:$0xff] %v608
    %805 = vst [vmem:[#allocation7 + $0x588] sm:$0xff] %v609
    %806 = vst [vmem:[#allocation7 + $0x590] sm:$0xff] %v610
    %807 = vst [vmem:[#allocation7 + $0x598] sm:$0xff] %v611
    %808 = vst [vmem:[#allocation7 + $0x5a0] sm:$0xff] %v612
    %809 = vst [vmem:[#allocation7 + $0x5a8] sm:$0xff] %v613
    %810 = vst [vmem:[#allocation7 + $0x5b0] sm:$0xff] %v614
    %811 = vst [vmem:[#allocation7 + $0x5b8] sm:$0xff] %v615
    %812 = vst [vmem:[#allocation7 + $0x5c0] sm:$0xff] %v616
    %813 = vst [vmem:[#allocation7 + $0x5c8] sm:$0xff] %v617
    %814 = vst [vmem:[#allocation7 + $0x5d0] sm:$0xff] %v618
    %815 = vst [vmem:[#allocation7 + $0x5d8] sm:$0xff] %v619
    %816 = vst [vmem:[#allocation7 + $0x5e0] sm:$0xff] %v620
    %817 = vst [vmem:[#allocation7 + $0x5e8] sm:$0xff] %v621
    %818 = vst [vmem:[#allocation7 + $0x5f0] sm:$0xff] %v622
    %819 = vst [vmem:[#allocation7 + $0x5f8] sm:$0xff] %v623
    %820 = vst [vmem:[#allocation7 + $0x600] sm:$0xff] %v624
    %821 = vst [vmem:[#allocation7 + $0x608] sm:$0xff] %v625
    %822 = vst [vmem:[#allocation7 + $0x610] sm:$0xff] %v626
    %823 = vst [vmem:[#allocation7 + $0x618] sm:$0xff] %v627
    // Predicated region
    $region18: #{tpu_custom_call.1} parent=1 // pred_check
      _
    $region19: #{tpu_custom_call.1} parent=1 // pred_check_branch
      %825 = sbr.rel (0) target = $region21
    $region20: #{tpu_custom_call.1} parent=1 // pred_region
      %s827 = ssub.s32 25088, 25088
      %828 = vsyncadd [#allocation4], %s827
      %s829 = sshll.u32 [#allocation7], 4
      %s830 = int_to_ptr.vmem [resolvable:$true] %s829
      %835 = dma.vmem_to_hbm [thread:$0]  %s830, 25088, %s2, [#allocation4], 128, 128, 8
    $region21: #{tpu_custom_call.1} parent=1 // pred_fallthru
      _
    // Predicated region
    $region22: #{tpu_custom_call.1} parent=1 // pred_check
      _
    $region23: #{tpu_custom_call.1} parent=1 // pred_check_branch
      %837 = sbr.rel (0) target = $region25
    $region24: #{tpu_custom_call.1} parent=1 // pred_region
      %838 = dma.done [#allocation4], 25088
    $region25: #{tpu_custom_call.1} parent=1 // pred_fallthru
      _
    %839 = vsyncpa [#allocation3], 1
    %840 = vsyncpa [#allocation6], 1
    %841 = vsyncpa [#allocation4], 1

</llo_original>
